<compile_context>
chip_gen: v7x
topology: tpu7x:2x2x1
jax: 0.10.0
libtpu: 0.0.40
codegen_flags: <defaults>
</compile_context>

<pallas_src>
import math

import jax
import jax.numpy as jnp
from jax.experimental import pallas as pl
from jax.experimental.pallas import tpu as pltpu


def _round_up(x, m):
    return ((x + m - 1) // m) * m


def _pad2d(a, rows, cols):
    return jnp.pad(a, ((0, rows - a.shape[0]), (0, cols - a.shape[1])))


def _vmem_capacity_bytes():
    try:
        return int(pltpu.get_tpu_info().vmem_capacity_bytes)
    except Exception:
        return 64 << 20  # conservative fallback = v7x per-TensorCore VMEM


# ----------------------------- kernels --------------------------------------

def _hidden_kernel(x_ref, w1_ref, b1_ref, w2_ref, b2_ref, w3_ref, b3_ref,
                   h_ref):
    """Fused layers 1-3: (Linear -> ReLU) x3. bf16 MXU matmuls, f32 accumulate."""
    # TODO(synk): chunk over 128-column slabs if ngf is large enough that the
    # (tb, ngf_p) f32 intermediates spill the vreg file.
    h = jnp.dot(x_ref[...], w1_ref[...], preferred_element_type=jnp.float32)
    h = jnp.maximum(h + b1_ref[...], 0.0).astype(jnp.bfloat16)
    h = jnp.dot(h, w2_ref[...], preferred_element_type=jnp.float32)
    h = jnp.maximum(h + b2_ref[...], 0.0).astype(jnp.bfloat16)
    h = jnp.dot(h, w3_ref[...], preferred_element_type=jnp.float32)
    h = jnp.maximum(h + b3_ref[...], 0.0)
    h_ref[...] = h.astype(h_ref.dtype)


def _out_kernel(h_ref, w4_ref, b4_ref, o_ref):
    """Layer 4: Linear(ngf -> nc*isize*isize), N-tiled, no activation."""
    o = jnp.dot(h_ref[...], w4_ref[...], preferred_element_type=jnp.float32)
    o_ref[...] = (o + b4_ref[...]).astype(o_ref.dtype)


# ----------------------------- wrapper ---------------------------------------

def prepare_params(params):
    """Pad + cast the Linear parameters ONCE (not per forward call).

    Weights -> bf16 (MXU-native), biases -> f32 (1, N).  Hidden feature dims
    are zero-padded to multiples of 128 (exact: ReLU(0)=0 contributes
    nothing); w4's output dim is kept at its logical size so the layer-4
    kernel can write the logical output shape with no post-slice copy.
    """
    (w1, b1), (w2, b2), (w3, b3), (w4, b4) = params
    nz, ngf = w1.shape
    out_dim = w4.shape[1]
    ngf_p = _round_up(ngf, 128)

    return dict(
        nz=nz, ngf=ngf, ngf_p=ngf_p, out_dim=out_dim,
        w1=_pad2d(w1, nz, ngf_p).astype(jnp.bfloat16),
        b1=_pad2d(b1.reshape(1, -1), 1, ngf_p).astype(jnp.float32),
        w2=_pad2d(w2, ngf_p, ngf_p).astype(jnp.bfloat16),
        b2=_pad2d(b2.reshape(1, -1), 1, ngf_p).astype(jnp.float32),
        w3=_pad2d(w3, ngf_p, ngf_p).astype(jnp.bfloat16),
        b3=_pad2d(b3.reshape(1, -1), 1, ngf_p).astype(jnp.float32),
        w4=_pad2d(w4, ngf_p, out_dim).astype(jnp.bfloat16),
        b4=b4.reshape(1, -1).astype(jnp.float32),
    )


def _choose_tn(tb, ngf_p, out_dim, budget_bytes):
    """Largest x128 N tile whose double-buffered working set fits the budget.
    The grid uses pl.cdiv, so tn does not need to divide out_dim."""
    per_col = 2 * (ngf_p * 2 + 4 + tb * 4)   # w4(bf16)+b4(f32)+out(f32), x2 buffers
    fixed = 2 * tb * ngf_p * 2               # h block (bf16), x2 buffers
    tn = (max(budget_bytes - fixed, 0) // per_col) // 128 * 128
    return min(max(tn, 128), _round_up(out_dim, 128))


def _resident_spec(shape, index_map):
    """Constant-index BlockSpec; single-buffered (block is never re-DMA'd)
    when this jax version supports pipeline_mode."""
    try:
        return pl.BlockSpec(shape, index_map, pipeline_mode=pl.Buffered(1))
    except Exception:
        return pl.BlockSpec(shape, index_map)


def mlp_g_forward(x, prepared, nc, isize):
    """x: (B, nz, 1, 1) or (B, nz). Returns (B, nc, isize, isize) float32."""
    B = x.shape[0]
    nz = prepared["nz"]
    ngf_p = prepared["ngf_p"]
    out_dim = prepared["out_dim"]
    assert out_dim == nc * isize * isize

    # input.view(input.size(0), input.size(1)); cast to bf16 (tiny).
    x2d = x.reshape(B, nz).astype(jnp.bfloat16)

    vmem_cap = _vmem_capacity_bytes()
    vmem_limit = (vmem_cap * 3) // 4       # ~96 MiB v5e/v6e, ~48 MiB v7x
    budget = vmem_cap // 2                 # tn-selection budget (headroom)

    # Batch tile: whole batch when it fits (no batch padding, no output slice);
    # otherwise 256-row tiles (v6e/v7x MXU height; ragged last tile via cdiv).
    tb = B if B <= 256 else 256
    nbt = pl.cdiv(B, tb)

    const2 = lambda i: (0, 0)

    # ---- layers 1-3 (tiny): batch-tiled grid, resident weights -------------
    # TODO(synk): K/N-tile the hidden stack if ngf grows so large that the
    # resident w2/w3 blocks no longer fit VMEM.
    h = pl.pallas_call(
        _hidden_kernel,
        out_shape=jax.ShapeDtypeStruct((B, ngf_p), jnp.bfloat16),
        grid_spec=pltpu.PrefetchScalarGridSpec(
            num_scalar_prefetch=0,
            grid=(nbt,),
            in_specs=[
                pl.BlockSpec((tb, nz), lambda i: (i, 0)),       # x: batch-tiled
                _resident_spec((nz, ngf_p), const2),            # w1
                _resident_spec((1, ngf_p), const2),             # b1
                _resident_spec((ngf_p, ngf_p), const2),         # w2
                _resident_spec((1, ngf_p), const2),             # b2
                _resident_spec((ngf_p, ngf_p), const2),         # w3
                _resident_spec((1, ngf_p), const2),             # b3
            ],
            out_specs=pl.BlockSpec((tb, ngf_p), lambda i: (i, 0)),
        ),
        compiler_params=pltpu.CompilerParams(
            dimension_semantics=("parallel",),
            vmem_limit_bytes=vmem_limit),
    )(x2d, prepared["w1"], prepared["b1"], prepared["w2"], prepared["b2"],
      prepared["w3"], prepared["b3"])

    # ---- layer 4 (dominant, HBM-bound on the w4 stream) ---------------------
    # grid = (N tiles, batch tiles); batch innermost -> each w4 block is read
    # from HBM exactly once and reused across all batch tiles.  No scratch
    # dependency -> both axes "parallel" (v7x megacore splits the w4 stream).
    tn = _choose_tn(tb, ngf_p, out_dim, budget)
    nnt = pl.cdiv(out_dim, tn)

    out2d = pl.pallas_call(
        _out_kernel,
        out_shape=jax.ShapeDtypeStruct((B, out_dim), jnp.float32),
        grid_spec=pltpu.PrefetchScalarGridSpec(
            num_scalar_prefetch=0,
            grid=(nnt, nbt),
            in_specs=[
                pl.BlockSpec((tb, ngf_p), lambda j, i: (i, 0)),  # h
                pl.BlockSpec((ngf_p, tn), lambda j, i: (0, j)),  # w4: N-tiled
                pl.BlockSpec((1, tn), lambda j, i: (0, j)),      # b4: N-tiled
            ],
            out_specs=pl.BlockSpec((tb, tn), lambda j, i: (i, j)),
        ),
        compiler_params=pltpu.CompilerParams(
            dimension_semantics=("parallel", "parallel"),
            vmem_limit_bytes=vmem_limit),
    )(h, prepared["w4"], prepared["b4"])

    # output.view(B, nc, isize, isize) -- reshape of the logical array (free).
    return out2d.reshape(B, nc, isize, isize)


def init_linear(key, in_features, out_features, dtype=jnp.float32):
    """PyTorch nn.Linear default init: U(-1/sqrt(in), 1/sqrt(in)).

    Weight returned as (in_features, out_features) for row-major matmul;
    bias returned as (1, out_features).
    """
    kw, kb = jax.random.split(key)
    bound = 1.0 / math.sqrt(in_features)
    w = jax.random.uniform(kw, (in_features, out_features), dtype,
                           minval=-bound, maxval=bound)
    b = jax.random.uniform(kb, (1, out_features), dtype,
                           minval=-bound, maxval=bound)
    return w, b


if __name__ == "__main__":
    # Small, module-consistent shapes.
    B = 2        # batch
    nz = 8       # noise dim
    ngf = 32     # hidden size
    nc = 4       # output channels
    isize = 16   # output spatial size

    key = jax.random.PRNGKey(0)
    k_x, k1, k2, k3, k4 = jax.random.split(key, 5)

    params = (
        init_linear(k1, nz, ngf),
        init_linear(k2, ngf, ngf),
        init_linear(k3, ngf, ngf),
        init_linear(k4, ngf, nc * isize * isize),
    )
    prepared = prepare_params(params)   # pad/cast ONCE, reused every forward

    # Generator noise input in NCHW convention: (B, nz, 1, 1)
    x = jax.random.normal(k_x, (B, nz, 1, 1), jnp.float32)

    out = mlp_g_forward(x, prepared, nc, isize)
    out = jax.block_until_ready(out)

    # Reference in plain JAX with the SAME bf16-matmul / f32-accumulate
    # contract the kernel uses (bf16 is what the MXU natively consumes).
    h = x.reshape(B, nz).astype(jnp.bfloat16)
    for i, (w, b) in enumerate(params):
        h = jnp.dot(h, w.astype(jnp.bfloat16),
                    preferred_element_type=jnp.float32) + b
        if i < 3:
            h = jnp.maximum(h, 0.0).astype(jnp.bfloat16)
    ref = h.reshape(B, nc, isize, isize)

    assert out.shape == (B, nc, isize, isize)
    assert out.dtype == jnp.float32
    assert jnp.allclose(out, ref, atol=1e-2, rtol=1e-2)

    print("KERNEL_OK")
</pallas_src>

<mosaic_0001>
module attributes {stable_mosaic.version = 11 : i64} {
  func.func @_hidden_kernel(%arg0: i32, %arg1: memref<2x8xbf16, #tpu.memory_space<vmem>>, %arg2: memref<8x128xbf16, #tpu.memory_space<vmem>>, %arg3: memref<1x128xf32, #tpu.memory_space<vmem>>, %arg4: memref<128x128xbf16, #tpu.memory_space<vmem>>, %arg5: memref<1x128xf32, #tpu.memory_space<vmem>>, %arg6: memref<128x128xbf16, #tpu.memory_space<vmem>>, %arg7: memref<1x128xf32, #tpu.memory_space<vmem>>, %arg8: memref<2x128xbf16, #tpu.memory_space<vmem>>) attributes {dimension_semantics = [#tpu.dimension_semantics<parallel>], iteration_bounds = array<i64: 1>, scalar_prefetch = 0 : i64, scratch_operands = 0 : i64, tpu.core_type = #tpu.core_type<tc>, window_params = [{transform_indices = @transform_0, window_bounds = array<i64: 2, 8>}, {pipeline_mode = #tpu.pipeline_mode<synchronous>, transform_indices = @transform_1, window_bounds = array<i64: 8, 128>}, {pipeline_mode = #tpu.pipeline_mode<synchronous>, transform_indices = @transform_2, window_bounds = array<i64: 1, 128>}, {pipeline_mode = #tpu.pipeline_mode<synchronous>, transform_indices = @transform_3, window_bounds = array<i64: 128, 128>}, {pipeline_mode = #tpu.pipeline_mode<synchronous>, transform_indices = @transform_4, window_bounds = array<i64: 1, 128>}, {pipeline_mode = #tpu.pipeline_mode<synchronous>, transform_indices = @transform_5, window_bounds = array<i64: 128, 128>}, {pipeline_mode = #tpu.pipeline_mode<synchronous>, transform_indices = @transform_6, window_bounds = array<i64: 1, 128>}, {transform_indices = @transform_7, window_bounds = array<i64: 2, 128>}]} {
    %c0 = arith.constant 0 : index
    %c0_0 = arith.constant 0 : index
    %0 = vector.load %arg1[%c0, %c0_0] : memref<2x8xbf16, #tpu.memory_space<vmem>>, vector<2x8xbf16>
    %c0_1 = arith.constant 0 : index
    %c0_2 = arith.constant 0 : index
    %1 = vector.load %arg2[%c0_1, %c0_2] : memref<8x128xbf16, #tpu.memory_space<vmem>>, vector<8x128xbf16>
    %cst = arith.constant dense<0.000000e+00> : vector<2x128xf32>
    %2 = tpu.matmul %0, %1, %cst {dimension_numbers = #tpu.dot_dimension_numbers<[1], [0], [0], [1], [0, 0, 1, 1], [], []>} : vector<2x8xbf16>, vector<8x128xbf16>, vector<2x128xf32> -> vector<2x128xf32>
    %c0_3 = arith.constant 0 : index
    %c0_4 = arith.constant 0 : index
    %3 = vector.load %arg3[%c0_3, %c0_4] : memref<1x128xf32, #tpu.memory_space<vmem>>, vector<1x128xf32>
    %4 = vector.broadcast %3 : vector<1x128xf32> to vector<2x128xf32>
    %5 = arith.addf %2, %4 : vector<2x128xf32>
    %cst_5 = arith.constant 0.000000e+00 : f32
    %6 = vector.broadcast %cst_5 : f32 to vector<2x128xf32>
    %7 = arith.maximumf %5, %6 : vector<2x128xf32>
    %8 = arith.truncf %7 : vector<2x128xf32> to vector<2x128xbf16>
    %c0_6 = arith.constant 0 : index
    %c0_7 = arith.constant 0 : index
    %9 = vector.load %arg4[%c0_6, %c0_7] : memref<128x128xbf16, #tpu.memory_space<vmem>>, vector<128x128xbf16>
    %cst_8 = arith.constant dense<0.000000e+00> : vector<2x128xf32>
    %10 = tpu.matmul %8, %9, %cst_8 {dimension_numbers = #tpu.dot_dimension_numbers<[1], [0], [0], [1], [0, 0, 1, 1], [], []>} : vector<2x128xbf16>, vector<128x128xbf16>, vector<2x128xf32> -> vector<2x128xf32>
    %c0_9 = arith.constant 0 : index
    %c0_10 = arith.constant 0 : index
    %11 = vector.load %arg5[%c0_9, %c0_10] : memref<1x128xf32, #tpu.memory_space<vmem>>, vector<1x128xf32>
    %12 = vector.broadcast %11 : vector<1x128xf32> to vector<2x128xf32>
    %13 = arith.addf %10, %12 : vector<2x128xf32>
    %cst_11 = arith.constant 0.000000e+00 : f32
    %14 = vector.broadcast %cst_11 : f32 to vector<2x128xf32>
    %15 = arith.maximumf %13, %14 : vector<2x128xf32>
    %16 = arith.truncf %15 : vector<2x128xf32> to vector<2x128xbf16>
    %c0_12 = arith.constant 0 : index
    %c0_13 = arith.constant 0 : index
    %17 = vector.load %arg6[%c0_12, %c0_13] : memref<128x128xbf16, #tpu.memory_space<vmem>>, vector<128x128xbf16>
    %cst_14 = arith.constant dense<0.000000e+00> : vector<2x128xf32>
    %18 = tpu.matmul %16, %17, %cst_14 {dimension_numbers = #tpu.dot_dimension_numbers<[1], [0], [0], [1], [0, 0, 1, 1], [], []>} : vector<2x128xbf16>, vector<128x128xbf16>, vector<2x128xf32> -> vector<2x128xf32>
    %c0_15 = arith.constant 0 : index
    %c0_16 = arith.constant 0 : index
    %19 = vector.load %arg7[%c0_15, %c0_16] : memref<1x128xf32, #tpu.memory_space<vmem>>, vector<1x128xf32>
    %20 = vector.broadcast %19 : vector<1x128xf32> to vector<2x128xf32>
    %21 = arith.addf %18, %20 : vector<2x128xf32>
    %cst_17 = arith.constant 0.000000e+00 : f32
    %22 = vector.broadcast %cst_17 : f32 to vector<2x128xf32>
    %23 = arith.maximumf %21, %22 : vector<2x128xf32>
    %24 = arith.truncf %23 : vector<2x128xf32> to vector<2x128xbf16>
    %c0_18 = arith.constant 0 : index
    %c0_19 = arith.constant 0 : index
    %25 = vector.load %arg8[%c0_18, %c0_19] : memref<2x128xbf16, #tpu.memory_space<vmem>>, vector<2x128xbf16>
    tpu.vector_store %arg8[%c0_18, %c0_19], %24 {strides = array<i32>} : memref<2x128xbf16, #tpu.memory_space<vmem>>, vector<2x128xbf16>,
    return
  }
  func.func @transform_0(%arg0: i32) -> (i32, i32) {
    %c0_i32 = arith.constant 0 : i32
    %c0_i32_0 = arith.constant 0 : i32
    return %arg0, %c0_i32 : i32, i32
  }
  func.func @transform_1(%arg0: i32) -> (i32, i32) {
    %c0_i32 = arith.constant 0 : i32
    %c0_i32_0 = arith.constant 0 : i32
    %c0_i32_1 = arith.constant 0 : i32
    return %c0_i32, %c0_i32_0 : i32, i32
  }
  func.func @transform_2(%arg0: i32) -> (i32, i32) {
    %c0_i32 = arith.constant 0 : i32
    %c0_i32_0 = arith.constant 0 : i32
    %c0_i32_1 = arith.constant 0 : i32
    return %c0_i32, %c0_i32_0 : i32, i32
  }
  func.func @transform_3(%arg0: i32) -> (i32, i32) {
    %c0_i32 = arith.constant 0 : i32
    %c0_i32_0 = arith.constant 0 : i32
    %c0_i32_1 = arith.constant 0 : i32
    return %c0_i32, %c0_i32_0 : i32, i32
  }
  func.func @transform_4(%arg0: i32) -> (i32, i32) {
    %c0_i32 = arith.constant 0 : i32
    %c0_i32_0 = arith.constant 0 : i32
    %c0_i32_1 = arith.constant 0 : i32
    return %c0_i32, %c0_i32_0 : i32, i32
  }
  func.func @transform_5(%arg0: i32) -> (i32, i32) {
    %c0_i32 = arith.constant 0 : i32
    %c0_i32_0 = arith.constant 0 : i32
    %c0_i32_1 = arith.constant 0 : i32
    return %c0_i32, %c0_i32_0 : i32, i32
  }
  func.func @transform_6(%arg0: i32) -> (i32, i32) {
    %c0_i32 = arith.constant 0 : i32
    %c0_i32_0 = arith.constant 0 : i32
    %c0_i32_1 = arith.constant 0 : i32
    return %c0_i32, %c0_i32_0 : i32, i32
  }
  func.func @transform_7(%arg0: i32) -> (i32, i32) {
    %c0_i32 = arith.constant 0 : i32
    %c0_i32_0 = arith.constant 0 : i32
    return %arg0, %c0_i32 : i32, i32
  }
}

</mosaic_0001>

<llo_original>
// kernel: tpu_custom_call.1
$region0: #{tpu_custom_call.1}
  #allocation0 [shape = 'u32[]', space=smem, size = 0x4, offset = 0x4, fixed_abs, tag = 'smem constant byte address 0x4 - core index']
  #allocation1 [shape = 'u32[144,128]{1,0:T(1,128)}', space=vmem, size = 0x12000, scoped, tag = 'internal scratch']
  %s0 = inlined_call_operand.hbm [shape: bf16[2,8], index: 0, kind: input, shape index: {}]
  %s1 = inlined_call_operand.hbm [shape: bf16[8,128], index: 1, kind: input, shape index: {}]
  %s2 = inlined_call_operand.vmem [shape: f32[1,128], index: 2, kind: input, shape index: {}]
  %s3 = inlined_call_operand.hbm [shape: bf16[128,128], index: 3, kind: input, shape index: {}]
  %s4 = inlined_call_operand.vmem [shape: f32[1,128], index: 4, kind: input, shape index: {}]
  %s5 = inlined_call_operand.hbm [shape: bf16[128,128], index: 5, kind: input, shape index: {}]
  %s6 = inlined_call_operand.vmem [shape: f32[1,128], index: 6, kind: input, shape index: {}]
  %s7 = inlined_call_operand.hbm [shape: bf16[2,128], index: 7, kind: output, shape index: {}]
  %s8 = sld [smem:[#allocation0]]
  $region54: #{tpu_custom_call.1} parent=0
    _
  %s10 = ssub.s32 1, %s8
  %s11 = scalar_select 0, %s10, %s8
  $region1: #{tpu_custom_call.1} parent=0
    #allocation2 [shape = 'u8[512]{0}', space=vmem, size = 0x400, scoped, tag = 'input window, operand 0, single buffered']
    #allocation3 [shape = 's32[1]{0}', space=sflag, size = 0x4, scoped, tag = 'scoped memory for tpu_custom_call.1']
    #allocation4 [shape = 's32[1]{0}', space=sflag, size = 0x4, scoped, tag = 'scoped memory for tpu_custom_call.1']
    #allocation5 [shape = 'u8[2048]{0}', space=vmem, size = 0x800, scoped, tag = 'input window, operand 1, single buffered']
    #allocation6 [shape = 's32[1]{0}', space=sflag, size = 0x4, scoped, tag = 'scoped memory for tpu_custom_call.1']
    #allocation7 [shape = 'u8[32768]{0}', space=vmem, size = 0x8000, scoped, tag = 'input window, operand 3, single buffered']
    #allocation8 [shape = 'u8[32768]{0}', space=vmem, size = 0x8000, scoped, tag = 'input window, operand 5, single buffered']
    #allocation9 [shape = 's32[1]{0}', space=sflag, size = 0x4, scoped, tag = 'scoped memory for tpu_custom_call.1']
    #allocation10 [shape = 'u8[512]{0}', space=vmem, size = 0x400, scoped, tag = 'output window, operand 0, single buffered']
    %12 = vsyncpa [#allocation3], 0
    %13 = vsyncpa [#allocation6], 0
    %14 = vsyncpa [#allocation9], 0
    %15 = vsyncpa [#allocation4], 0
    // Predicated region
    $region2: #{tpu_custom_call.1} parent=1 // pred_check
      _
    $region3: #{tpu_custom_call.1} parent=1 // pred_check_branch
      %17 = sbr.rel (0) target = $region5
    $region4: #{tpu_custom_call.1} parent=1 // pred_region
      %s19 = ssub.s32 16, 16
      %20 = vsyncadd [#allocation3], %s19
      %s22 = sshll.u32 [#allocation2], 4
      %s23 = int_to_ptr.vmem [resolvable:$true] %s22
      %25 = dma.hbm_to_vmem [thread:$0]  %s0, 16, %s23, [#allocation3]
    $region5: #{tpu_custom_call.1} parent=1 // pred_fallthru
      _
    // Predicated region
    $region6: #{tpu_custom_call.1} parent=1 // pred_check
      _
    $region7: #{tpu_custom_call.1} parent=1 // pred_check_branch
      %27 = sbr.rel (0) target = $region9
    $region8: #{tpu_custom_call.1} parent=1 // pred_region
      %s29 = ssub.s32 64, 64
      %30 = vsyncadd [#allocation6], %s29
      %s32 = sshll.u32 [#allocation5], 4
      %s33 = int_to_ptr.vmem [resolvable:$true] %s32
      %35 = dma.hbm_to_vmem [thread:$0]  %s1, 64, %s33, [#allocation6]
    $region9: #{tpu_custom_call.1} parent=1 // pred_fallthru
      _
    // Predicated region
    $region10: #{tpu_custom_call.1} parent=1 // pred_check
      _
    $region11: #{tpu_custom_call.1} parent=1 // pred_check_branch
      %37 = sbr.rel (0) target = $region13
    $region12: #{tpu_custom_call.1} parent=1 // pred_region
      _
    $region13: #{tpu_custom_call.1} parent=1 // pred_fallthru
      _
    // Predicated region
    $region14: #{tpu_custom_call.1} parent=1 // pred_check
      _
    $region15: #{tpu_custom_call.1} parent=1 // pred_check_branch
      %39 = sbr.rel (0) target = $region17
    $region16: #{tpu_custom_call.1} parent=1 // pred_region
      %s41 = ssub.s32 1024, 1024
      %42 = vsyncadd [#allocation6], %s41
      %s43 = sshll.u32 [#allocation7], 4
      %s44 = int_to_ptr.vmem [resolvable:$true] %s43
      %49 = dma.hbm_to_vmem [thread:$0]  %s3, 1024, %s44, [#allocation6], 64, 64, 4
    $region17: #{tpu_custom_call.1} parent=1 // pred_fallthru
      _
    // Predicated region
    $region18: #{tpu_custom_call.1} parent=1 // pred_check
      _
    $region19: #{tpu_custom_call.1} parent=1 // pred_check_branch
      %51 = sbr.rel (0) target = $region21
    $region20: #{tpu_custom_call.1} parent=1 // pred_region
      _
    $region21: #{tpu_custom_call.1} parent=1 // pred_fallthru
      _
    // Predicated region
    $region22: #{tpu_custom_call.1} parent=1 // pred_check
      _
    $region23: #{tpu_custom_call.1} parent=1 // pred_check_branch
      %53 = sbr.rel (0) target = $region25
    $region24: #{tpu_custom_call.1} parent=1 // pred_region
      %s55 = ssub.s32 1024, 1024
      %56 = vsyncadd [#allocation9], %s55
      %s57 = sshll.u32 [#allocation8], 4
      %s58 = int_to_ptr.vmem [resolvable:$true] %s57
      %63 = dma.hbm_to_vmem [thread:$0]  %s5, 1024, %s58, [#allocation9], 64, 64, 4
    $region25: #{tpu_custom_call.1} parent=1 // pred_fallthru
      _
    // Predicated region
    $region26: #{tpu_custom_call.1} parent=1 // pred_check
      _
    $region27: #{tpu_custom_call.1} parent=1 // pred_check_branch
      %65 = sbr.rel (0) target = $region29
    $region28: #{tpu_custom_call.1} parent=1 // pred_region
      _
    $region29: #{tpu_custom_call.1} parent=1 // pred_fallthru
      _
    // Predicated region
    $region30: #{tpu_custom_call.1} parent=1 // pred_check
      _
    $region31: #{tpu_custom_call.1} parent=1 // pred_check_branch
      %67 = sbr.rel (0) target = $region33
    $region32: #{tpu_custom_call.1} parent=1 // pred_region
      %68 = dma.done [#allocation3], 16
    $region33: #{tpu_custom_call.1} parent=1 // pred_fallthru
      _
    // Predicated region
    $region34: #{tpu_custom_call.1} parent=1 // pred_check
      _
    $region35: #{tpu_custom_call.1} parent=1 // pred_check_branch
      %70 = sbr.rel (0) target = $region37
    $region36: #{tpu_custom_call.1} parent=1 // pred_region
      %71 = dma.done [#allocation6], 64
    $region37: #{tpu_custom_call.1} parent=1 // pred_fallthru
      _
    // Predicated region
    $region38: #{tpu_custom_call.1} parent=1 // pred_check
      _
    $region39: #{tpu_custom_call.1} parent=1 // pred_check_branch
      %73 = sbr.rel (0) target = $region41
    $region40: #{tpu_custom_call.1} parent=1 // pred_region
      %74 = dma.done [#allocation6], 1024
    $region41: #{tpu_custom_call.1} parent=1 // pred_fallthru
      _
    // Predicated region
    $region42: #{tpu_custom_call.1} parent=1 // pred_check
      _
    $region43: #{tpu_custom_call.1} parent=1 // pred_check_branch
      %76 = sbr.rel (0) target = $region45
    $region44: #{tpu_custom_call.1} parent=1 // pred_region
      %77 = dma.done [#allocation9], 1024
    $region45: #{tpu_custom_call.1} parent=1 // pred_fallthru
      _
    %v79 = vld [vmem:[#allocation2] sm:$0x1]
    %v80 = vld [vmem:[#allocation5] sm:$0xf]
    %v81 = vld [vmem:[%s2] sm:$0x1]
    %v83 = vlaneseq
    %v84 = vshrl.u32 %v83, 7
    %v85 = vsub.s32 0, %v84
    %v86 = vrot.slane %v81, %v85
    %vm88 = vcmask 64512
    %v90 = vsel %vm88, %v79, 0
    %vm92 = vcmask 1043456
    %v94 = vsel %vm92, %v80, 0
    %96 = vmatprep.subr.bf16.mxu0 0
    %97 = vmatpush1.bf16.msra.mxu0 %v94
    %98 = vmatprep.subr.bf16.mxu0 0
    %99 = vmatpush1.bf16.msra.mxu0 0
    %100 = vmatprep.subr.bf16.mxu0 0
    %101 = vmatpush1.bf16.msra.mxu0 0
    %102 = vmatprep.subr.bf16.mxu0 0
    %103 = vmatpush1.bf16.msra.mxu0 0
    %104 = vmatprep.subr.bf16.mxu0 0
    %105 = vmatpush1.bf16.msra.mxu0 0
    %106 = vmatprep.subr.bf16.mxu0 0
    %107 = vmatpush1.bf16.msra.mxu0 0
    %108 = vmatprep.subr.bf16.mxu0 0
    %109 = vmatpush1.bf16.msra.mxu0 0
    %110 = vmatprep.subr.bf16.mxu0 0
    %111 = vmatpush1.bf16.msra.mxu0 0
    %112 = vmatprep.subr.bf16.mxu0 0
    %113 = vmatpush1.bf16.msra.mxu0 0
    %114 = vmatprep.subr.bf16.mxu0 0
    %115 = vmatpush1.bf16.msra.mxu0 0
    %116 = vmatprep.subr.bf16.mxu0 0
    %117 = vmatpush1.bf16.msra.mxu0 0
    %118 = vmatprep.subr.bf16.mxu0 0
    %119 = vmatpush1.bf16.msra.mxu0 0
    %120 = vmatprep.subr.bf16.mxu0 0
    %121 = vmatpush1.bf16.msra.mxu0 0
    %122 = vmatprep.subr.bf16.mxu0 0
    %123 = vmatpush1.bf16.msra.mxu0 0
    %124 = vmatprep.subr.bf16.mxu0 0
    %125 = vmatpush1.bf16.msra.mxu0 0
    %126 = vmatprep.subr.bf16.mxu0 0
    %127 = vmatpush1.bf16.msra.mxu0 0
    %128 = vmatprep.mubr.bf16.mxu0 0
    %129 = vmatmul.mubr.bf16.gmra.mrb[0].mxu0 %v90
    %v130 = vpop.f32.mrb[0].mxu0
    %v131 = vadd.f32 %v86, %v130
    %v132 = vpop.f32.mrb[0].mxu0
    %v133 = vpop.f32.mrb[0].mxu0
    %v134 = vpop.f32.mrb[0].mxu0
    %135 = vdwg.mxu0
    %v136 = vmax.f32 %v131, 0.0
    %v137 = vpack.c.bf16 %v136, %v136
    %v138 = vld [vmem:[#allocation7] sm:$0xf]
    %v139 = vld [vmem:[#allocation7 + $0x4] sm:$0xf]
    %v140 = vld [vmem:[#allocation7 + $0x8] sm:$0xf]
    %v141 = vld [vmem:[#allocation7 + $0xc] sm:$0xf]
    %v142 = vld [vmem:[#allocation7 + $0x10] sm:$0xf]
    %v143 = vld [vmem:[#allocation7 + $0x14] sm:$0xf]
    %v144 = vld [vmem:[#allocation7 + $0x18] sm:$0xf]
    %v145 = vld [vmem:[#allocation7 + $0x1c] sm:$0xf]
    %v146 = vld [vmem:[#allocation7 + $0x20] sm:$0xf]
    %v147 = vld [vmem:[#allocation7 + $0x24] sm:$0xf]
    %v148 = vld [vmem:[#allocation7 + $0x28] sm:$0xf]
    %v149 = vld [vmem:[#allocation7 + $0x2c] sm:$0xf]
    %v150 = vld [vmem:[#allocation7 + $0x30] sm:$0xf]
    %v151 = vld [vmem:[#allocation7 + $0x34] sm:$0xf]
    %v152 = vld [vmem:[#allocation7 + $0x38] sm:$0xf]
    %v153 = vld [vmem:[#allocation7 + $0x3c] sm:$0xf]
    %v154 = vld [vmem:[%s4] sm:$0x1]
    %v156 = vlaneseq
    %v157 = vshrl.u32 %v156, 7
    %v158 = vsub.s32 0, %v157
    %v159 = vrot.slane %v154, %v158
    %v177 = vunpack.c.l.b16 %v138
    %v178 = vunpack.c.l.b16 %v139
    %v179 = vunpack.c.l.b16 %v140
    %v180 = vunpack.c.l.b16 %v141
    %v181 = vunpack.c.l.b16 %v142
    %v182 = vunpack.c.l.b16 %v143
    %v183 = vunpack.c.l.b16 %v144
    %v184 = vunpack.c.l.b16 %v145
    %v185 = vunpack.c.l.b16 %v146
    %v186 = vunpack.c.l.b16 %v147
    %v187 = vunpack.c.l.b16 %v148
    %v188 = vunpack.c.l.b16 %v149
    %v189 = vunpack.c.l.b16 %v150
    %v190 = vunpack.c.l.b16 %v151
    %v191 = vunpack.c.l.b16 %v152
    %v192 = vunpack.c.l.b16 %v153
    %v193 = vpack.c.b16 %v178, %v177
    %v194 = vpack.c.b16 %v180, %v179
    %v195 = vpack.c.b16 %v182, %v181
    %v196 = vpack.c.b16 %v184, %v183
    %v197 = vpack.c.b16 %v186, %v185
    %v198 = vpack.c.b16 %v188, %v187
    %v199 = vpack.c.b16 %v190, %v189
    %v200 = vpack.c.b16 %v192, %v191
    %209 = vmatprep.subr.bf16.mxu0 0
    %210 = vmatpush1.bf16.msra.mxu0 %v193
    %211 = vmatprep.subr.bf16.mxu0 0
    %212 = vmatpush1.bf16.msra.mxu0 %v194
    %213 = vmatprep.subr.bf16.mxu0 0
    %214 = vmatpush1.bf16.msra.mxu0 %v195
    %215 = vmatprep.subr.bf16.mxu0 0
    %216 = vmatpush1.bf16.msra.mxu0 %v196
    %217 = vmatprep.subr.bf16.mxu0 0
    %218 = vmatpush1.bf16.msra.mxu0 %v197
    %219 = vmatprep.subr.bf16.mxu0 0
    %220 = vmatpush1.bf16.msra.mxu0 %v198
    %221 = vmatprep.subr.bf16.mxu0 0
    %222 = vmatpush1.bf16.msra.mxu0 %v199
    %223 = vmatprep.subr.bf16.mxu0 0
    %224 = vmatpush1.bf16.msra.mxu0 %v200
    %225 = vmatprep.subr.bf16.mxu0 0
    %226 = vmatpush1.bf16.msra.mxu0 0
    %227 = vmatprep.subr.bf16.mxu0 0
    %228 = vmatpush1.bf16.msra.mxu0 0
    %229 = vmatprep.subr.bf16.mxu0 0
    %230 = vmatpush1.bf16.msra.mxu0 0
    %231 = vmatprep.subr.bf16.mxu0 0
    %232 = vmatpush1.bf16.msra.mxu0 0
    %233 = vmatprep.subr.bf16.mxu0 0
    %234 = vmatpush1.bf16.msra.mxu0 0
    %235 = vmatprep.subr.bf16.mxu0 0
    %236 = vmatpush1.bf16.msra.mxu0 0
    %237 = vmatprep.subr.bf16.mxu0 0
    %238 = vmatpush1.bf16.msra.mxu0 0
    %239 = vmatprep.subr.bf16.mxu0 0
    %240 = vmatpush1.bf16.msra.mxu0 0
    %241 = vmatprep.mubr.bf16.mxu0 0
    %242 = vmatmul.mubr.bf16.gmra.mrb[0].mxu0 %v137
    %v243 = vpop.f32.mrb[0].mxu0
    %v244 = vadd.f32 %v159, %v243
    %v245 = vpop.f32.mrb[0].mxu0
    %v246 = vpop.f32.mrb[0].mxu0
    %v247 = vpop.f32.mrb[0].mxu0
    %248 = vdwg.mxu0
    %v249 = vmax.f32 %v244, 0.0
    %v250 = vpack.c.bf16 %v249, %v249
    %v251 = vld [vmem:[#allocation8] sm:$0xf]
    %v252 = vld [vmem:[#allocation8 + $0x4] sm:$0xf]
    %v253 = vld [vmem:[#allocation8 + $0x8] sm:$0xf]
    %v254 = vld [vmem:[#allocation8 + $0xc] sm:$0xf]
    %v255 = vld [vmem:[#allocation8 + $0x10] sm:$0xf]
    %v256 = vld [vmem:[#allocation8 + $0x14] sm:$0xf]
    %v257 = vld [vmem:[#allocation8 + $0x18] sm:$0xf]
    %v258 = vld [vmem:[#allocation8 + $0x1c] sm:$0xf]
    %v259 = vld [vmem:[#allocation8 + $0x20] sm:$0xf]
    %v260 = vld [vmem:[#allocation8 + $0x24] sm:$0xf]
    %v261 = vld [vmem:[#allocation8 + $0x28] sm:$0xf]
    %v262 = vld [vmem:[#allocation8 + $0x2c] sm:$0xf]
    %v263 = vld [vmem:[#allocation8 + $0x30] sm:$0xf]
    %v264 = vld [vmem:[#allocation8 + $0x34] sm:$0xf]
    %v265 = vld [vmem:[#allocation8 + $0x38] sm:$0xf]
    %v266 = vld [vmem:[#allocation8 + $0x3c] sm:$0xf]
    %v267 = vld [vmem:[%s6] sm:$0x1]
    %v269 = vlaneseq
    %v270 = vshrl.u32 %v269, 7
    %v271 = vsub.s32 0, %v270
    %v272 = vrot.slane %v267, %v271
    %v290 = vunpack.c.l.b16 %v251
    %v291 = vunpack.c.l.b16 %v252
    %v292 = vunpack.c.l.b16 %v253
    %v293 = vunpack.c.l.b16 %v254
    %v294 = vunpack.c.l.b16 %v255
    %v295 = vunpack.c.l.b16 %v256
    %v296 = vunpack.c.l.b16 %v257
    %v297 = vunpack.c.l.b16 %v258
    %v298 = vunpack.c.l.b16 %v259
    %v299 = vunpack.c.l.b16 %v260
    %v300 = vunpack.c.l.b16 %v261
    %v301 = vunpack.c.l.b16 %v262
    %v302 = vunpack.c.l.b16 %v263
    %v303 = vunpack.c.l.b16 %v264
    %v304 = vunpack.c.l.b16 %v265
    %v305 = vunpack.c.l.b16 %v266
    %v306 = vpack.c.b16 %v291, %v290
    %v307 = vpack.c.b16 %v293, %v292
    %v308 = vpack.c.b16 %v295, %v294
    %v309 = vpack.c.b16 %v297, %v296
    %v310 = vpack.c.b16 %v299, %v298
    %v311 = vpack.c.b16 %v301, %v300
    %v312 = vpack.c.b16 %v303, %v302
    %v313 = vpack.c.b16 %v305, %v304
    %322 = vmatprep.subr.bf16.mxu0 0
    %323 = vmatpush1.bf16.msra.mxu0 %v306
    %324 = vmatprep.subr.bf16.mxu0 0
    %325 = vmatpush1.bf16.msra.mxu0 %v307
    %326 = vmatprep.subr.bf16.mxu0 0
    %327 = vmatpush1.bf16.msra.mxu0 %v308
    %328 = vmatprep.subr.bf16.mxu0 0
    %329 = vmatpush1.bf16.msra.mxu0 %v309
    %330 = vmatprep.subr.bf16.mxu0 0
    %331 = vmatpush1.bf16.msra.mxu0 %v310
    %332 = vmatprep.subr.bf16.mxu0 0
    %333 = vmatpush1.bf16.msra.mxu0 %v311
    %334 = vmatprep.subr.bf16.mxu0 0
    %335 = vmatpush1.bf16.msra.mxu0 %v312
    %336 = vmatprep.subr.bf16.mxu0 0
    %337 = vmatpush1.bf16.msra.mxu0 %v313
    %338 = vmatprep.subr.bf16.mxu0 0
    %339 = vmatpush1.bf16.msra.mxu0 0
    %340 = vmatprep.subr.bf16.mxu0 0
    %341 = vmatpush1.bf16.msra.mxu0 0
    %342 = vmatprep.subr.bf16.mxu0 0
    %343 = vmatpush1.bf16.msra.mxu0 0
    %344 = vmatprep.subr.bf16.mxu0 0
    %345 = vmatpush1.bf16.msra.mxu0 0
    %346 = vmatprep.subr.bf16.mxu0 0
    %347 = vmatpush1.bf16.msra.mxu0 0
    %348 = vmatprep.subr.bf16.mxu0 0
    %349 = vmatpush1.bf16.msra.mxu0 0
    %350 = vmatprep.subr.bf16.mxu0 0
    %351 = vmatpush1.bf16.msra.mxu0 0
    %352 = vmatprep.subr.bf16.mxu0 0
    %353 = vmatpush1.bf16.msra.mxu0 0
    %354 = vmatprep.mubr.bf16.mxu0 0
    %355 = vmatmul.mubr.bf16.gmra.mrb[0].mxu0 %v250
    %v356 = vpop.f32.mrb[0].mxu0
    %v357 = vadd.f32 %v272, %v356
    %v358 = vpop.f32.mrb[0].mxu0
    %v359 = vpop.f32.mrb[0].mxu0
    %v360 = vpop.f32.mrb[0].mxu0
    %361 = vdwg.mxu0
    %v362 = vmax.f32 %v357, 0.0
    %v363 = vpack.c.bf16 %v362, %v362
    %364 = vst [vmem:[#allocation10] sm:$0x1] %v363
    // Predicated region
    $region46: #{tpu_custom_call.1} parent=1 // pred_check
      _
    $region47: #{tpu_custom_call.1} parent=1 // pred_check_branch
      %366 = sbr.rel (0) target = $region49
    $region48: #{tpu_custom_call.1} parent=1 // pred_region
      %s368 = ssub.s32 16, 16
      %369 = vsyncadd [#allocation4], %s368
      %s371 = sshll.u32 [#allocation10], 4
      %s372 = int_to_ptr.vmem [resolvable:$true] %s371
      %374 = dma.vmem_to_hbm [thread:$0]  %s372, 16, %s7, [#allocation4]
    $region49: #{tpu_custom_call.1} parent=1 // pred_fallthru
      _
    // Predicated region
    $region50: #{tpu_custom_call.1} parent=1 // pred_check
      _
    $region51: #{tpu_custom_call.1} parent=1 // pred_check_branch
      %376 = sbr.rel (0) target = $region53
    $region52: #{tpu_custom_call.1} parent=1 // pred_region
      %377 = dma.done [#allocation4], 16
    $region53: #{tpu_custom_call.1} parent=1 // pred_fallthru
      _
    %378 = vsyncpa [#allocation3], 1
    %379 = vsyncpa [#allocation6], 1
    %380 = vsyncpa [#allocation9], 1
    %381 = vsyncpa [#allocation4], 1

</llo_original>
